<compile_context>
chip_gen: v7x
topology: tpu7x:2x2x1
jax: 0.10.0
libtpu: 0.0.40
codegen_flags: <defaults>
</compile_context>

<pallas_src>
import functools

import jax
import jax.numpy as jnp
from jax.experimental import pallas as pl
from jax.experimental.pallas import tpu as pltpu
from jax.scipy.special import erf as _erf_exact_ref

CP = 128    # every conv channel axis is zero-padded to the 128-lane vreg width
HALO = 8    # zeroed halo rows around activations in scratch (>= max conv padding of 8)
OFF = 16    # row offset of real data inside the VMEM activation scratch buffers

VMEM_SPEC = pl.BlockSpec(memory_space=pltpu.MemorySpace.VMEM)


# ----------------------------------------------------------------------------
# In-kernel math helpers
# ----------------------------------------------------------------------------
def _erf_approx(x):
    # Abramowitz & Stegun 7.1.26 (|err| < 1.5e-7, below bf16 resolution).  The divide is an
    # EUP approximate reciprocal + one Newton step, keeping it off the VPU critical path.
    a1, a2, a3, a4, a5 = 0.254829592, -0.284496736, 1.421413741, -1.453152027, 1.061405429
    p = 0.3275911
    ax = jnp.abs(x)
    d = 1.0 + p * ax
    t0 = pl.reciprocal(d, approx=True)
    t = t0 * (2.0 - d * t0)
    poly = ((((a5 * t + a4) * t + a3) * t + a2) * t + a1) * t
    y = 1.0 - poly * jnp.exp(-ax * ax)
    return jnp.where(x >= 0.0, y, -y)


def _gelu(x):
    return 0.5 * x * (1.0 + _erf_approx(x * 0.7071067811865476))


# ----------------------------------------------------------------------------
# pltpu.roll shift-orientation probe (run once at setup; makes tap packing robust)
# ----------------------------------------------------------------------------
def _roll_probe_kernel(x_ref, o_ref):
    o_ref[...] = pltpu.roll(x_ref[...], 1, axis=1)


def _detect_roll_sign():
    """Returns s such that pltpu.roll(x, (s*k) % 128, axis=1) moves lane 0 to lane k."""
    x = jax.lax.broadcasted_iota(jnp.float32, (8, CP), 1)
    y = pl.pallas_call(
        _roll_probe_kernel,
        out_shape=jax.ShapeDtypeStruct((8, CP), jnp.float32),
        in_specs=[VMEM_SPEC],
        out_specs=VMEM_SPEC,
    )(x)
    return 1 if int(y[0, 1]) == 0 else -1


# ----------------------------------------------------------------------------
# Kernel 1: whole conv trunk (lconv stack + dconv1 + dconv2 + residual GELUs)
# ----------------------------------------------------------------------------
def _convnet_kernel(x0_ref, w_ref, sc_ref, sh_ref, o_ref, buf_a, buf_b, *, cfg, rsign):
    """One batch element (grid over B).

    x0_ref : (L, CP) bf16   layer-0 input, taps already im2col-packed along lanes
    w_ref  : (NG, CP, CP) bf16   tap-group-packed weights for all 12 conv layers
    sc_ref / sh_ref : (12, 1, CP) f32   folded BatchNorm / bias scale & shift
    o_ref  : (T, CP) f32    h_in = gelu(out2 + out3), input to the finetune head
    buf_a / buf_b : (R, CP) f32 VMEM scratch; activations ping-pong between them
    """
    f32, bf16 = jnp.float32, jnp.bfloat16
    zero_halo = jnp.zeros((HALO, CP), f32)

    def epilogue(acc, li):
        y = acc * sc_ref[li] + sh_ref[li]
        act = cfg[li]["act"]
        if act == "relu":
            y = jnp.maximum(y, 0.0)
        elif act == "gelu":
            y = _gelu(y)
        return y

    def store_act(dst, y, length):
        dst[pl.ds(OFF - HALO, HALO), :] = zero_halo
        dst[pl.ds(OFF, length), :] = y
        dst[pl.ds(OFF + length, HALO), :] = zero_halo

    def conv_layer(src, dst, li):
        c = cfg[li]
        k_taps, dil, pad, cin = c["K"], c["dil"], c["pad"], c["cin"]
        gs, l_out, pool = c["gs"], c["L_out"], c["pool"]
        base = OFF - pad
        acc = None
        for g in range(c["G"]):
            ntaps = min(gs, k_taps - g * gs)
            # Tap-stacked LHS for this group: tap j's channels are placed at lanes
            # [j*cin, (j+1)*cin) with an XLU lane roll (padded lanes are zero, so the
            # sum performs exact placement).  G dots per layer instead of K.
            lhs = src[pl.ds(base + g * gs * dil, l_out), :]
            for j in range(1, ntaps):
                win = src[pl.ds(base + (g * gs + j) * dil, l_out), :]
                lhs = lhs + pltpu.roll(win, (rsign * j * cin) % CP, axis=1)
            part = jnp.dot(lhs.astype(bf16), w_ref[c["w_off"] + g],
                           preferred_element_type=f32)
            acc = part if acc is None else acc + part
        y = epilogue(acc, li)
        if pool > 1:
            # Fused MaxPool1d(pool, stride=pool).  Un-pooled rows are staged in the dst
            # scratch (pure VMEM traffic, no extra allocation, never HBM) and reduced
            # with strided reads.
            dst[pl.ds(OFF, l_out), :] = y
            lo = l_out // pool
            y = dst[pl.ds(OFF, lo, stride=pool), :]
            for j in range(1, pool):
                y = jnp.maximum(y, dst[pl.ds(OFF + j, lo, stride=pool), :])
            length = lo
        else:
            length = l_out
        store_act(dst, y, length)
        return y

    # Layer 0: the wrapper packed all K*Cin = 44 input taps along lanes, so the first
    # (longest) conv is a single 128-wide MXU contraction with no halo handling at all.
    y = epilogue(jnp.dot(x0_ref[...], w_ref[cfg[0]["w_off"]],
                         preferred_element_type=f32), 0)
    store_act(buf_a, y, cfg[0]["L_out"])

    # Remaining lconv layers: activation ping-pongs between the two VMEM scratch buffers.
    src, dst = buf_a, buf_b
    for li in range(1, 8):
        y = conv_layer(src, dst, li)
        src, dst = dst, src
    out1 = y                                   # (T, CP) lconv output, kept as a value

    buf_x, buf_y = src, dst                    # buf_x holds out1 (+halo), buf_y is free
    conv_layer(buf_x, buf_y, 8)                # dconv1[0]: dil=2 conv + BN + GELU
    out2 = conv_layer(buf_y, buf_x, 9)         # dconv1[1]: conv + BN
    z = _gelu(out2 + out1)                     # residual #1 -> dconv2 input
    store_act(buf_y, z, cfg[10]["L_in"])
    conv_layer(buf_y, buf_x, 10)               # dconv2[0]: dil=4 conv + BN + GELU
    out3 = conv_layer(buf_x, buf_y, 11)        # dconv2[1]: conv + BN
    o_ref[...] = _gelu(out2 + out3)            # residual #2 -> head input


# ----------------------------------------------------------------------------
# Kernel 2: whole finetune head (projection, 2-layer BiGRU, FFN, bin select, head)
# ----------------------------------------------------------------------------
def _head_kernel(hin_ref, pw_ref, pb_ref, wih_ref, bih_ref, whh_ref, bhh_ref,
                 w1_ref, b1_ref, w2_ref, b2_ref, wh_ref, bh_ref, o_ref, *, H, idx):
    B, T, _ = hin_ref.shape
    f32, bf16 = jnp.float32, jnp.bfloat16

    def mm(a, w):   # bf16 MXU operands, f32 accumulation (weights are pre-cast to bf16)
        return jnp.dot(a.astype(bf16), w, preferred_element_type=f32)

    def cell(xg, h, whh, bhh):   # PyTorch GRU cell; xg (1,3H), h (1,H)
        hg = mm(h, whh) + bhh
        r = jax.nn.sigmoid(xg[:, 0:H] + hg[:, 0:H])
        z = jax.nn.sigmoid(xg[:, H:2 * H] + hg[:, H:2 * H])
        n = jnp.tanh(xg[:, 2 * H:3 * H] + r * hg[:, 2 * H:3 * H])   # b_hn inside r*(.)
        return (1.0 - z) * n + z * h

    pw, pb = pw_ref[...], pb_ref[...]
    wih0, bih0, wih1, bih1 = wih_ref[0], bih_ref[0], wih_ref[1], bih_ref[1]
    whh0f, whh0b, whh1f, whh1b = whh_ref[0], whh_ref[1], whh_ref[2], whh_ref[3]
    bhh0f, bhh0b, bhh1f, bhh1b = bhh_ref[0], bhh_ref[1], bhh_ref[2], bhh_ref[3]
    w1, b1 = w1_ref[...], b1_ref[...]
    w2, b2 = w2_ref[...], b2_ref[...]
    wh, bh = wh_ref[...], bh_ref[...]
    h0 = jnp.zeros((1, H), f32)

    for b in range(B):   # B tiny & static; per-element keeps all slicing on leading dims
        xp = mm(hin_ref[b], pw) + pb                         # (T, E) 1x1-conv projection
        xg0 = mm(xp, wih0) + bih0                            # (T, 6H) input-gate projections
        # ---- GRU layer 0: full sequence, both directions ----
        h = h0
        h0f = []
        for t in range(T):
            h = cell(xg0[t:t + 1, 0:3 * H], h, whh0f, bhh0f)
            h0f.append(h)
        h = h0
        h0b = [None] * T
        for t in range(T - 1, -1, -1):
            h = cell(xg0[t:t + 1, 3 * H:6 * H], h, whh0b, bhh0b)
            h0b[t] = h
        # ---- GRU layer 1: input = [fwd, bwd]; weight rows split to avoid a lane concat ----
        xg1 = [mm(h0f[t], wih1[0:H, :]) + mm(h0b[t], wih1[H:2 * H, :]) + bih1
               for t in range(T)]
        h = h0
        for t in range(idx + 1):                 # forward recurrence only up to the TSS bin
            h = cell(xg1[t][:, 0:3 * H], h, whh1f, bhh1f)
        hf = h
        h = h0
        for t in range(T - 1, idx - 1, -1):      # backward recurrence only down to the bin
            h = cell(xg1[t][:, 3 * H:6 * H], h, whh1b, bhh1b)
        hb = h
        # ---- TSS bin selected BEFORE the FFN (position-wise ops commute with the select) ----
        y = mm(hf, w1[0:H, :]) + mm(hb, w1[H:2 * H, :]) + b1
        y = jnp.maximum(y, 0.0)
        y = jnp.maximum(mm(y, w2) + b2, 0.0)
        xs = xp[idx:idx + 1, :] + y              # x + x_rnn at the TSS bin
        o_ref[pl.ds(b, 1), :] = mm(xs, wh) + bh


# ----------------------------------------------------------------------------
# Forward wrapper: two pallas_calls total
# ----------------------------------------------------------------------------
def convnet_forward(p, x_ncl):
    cfg = p["cfg"]
    B = x_ncl.shape[0]
    c0 = cfg[0]

    # One-time input prep (tiny XLA glue): NCL -> channels-last and im2col-pack layer 0's
    # K=11 taps x 4 channels along the 128 lanes.
    x = jnp.transpose(x_ncl, (0, 2, 1)).astype(jnp.float32)          # (B, L, 4)
    xp = jnp.pad(x, ((0, 0), (c0["pad"], c0["pad"]), (0, 0)))
    x0 = jnp.concatenate([xp[:, k:k + c0["L_out"], :] for k in range(c0["K"])], axis=-1)
    x0 = jnp.pad(x0, ((0, 0), (0, 0), (0, CP - x0.shape[-1]))).astype(jnp.bfloat16)

    T = cfg[-1]["L_new"]
    NG, NL = p["w"].shape[0], len(cfg)
    buf_rows = (OFF + max(c["L_out"] for c in cfg) + HALO + 7) // 8 * 8

    # TODO(synk): at realistic genomics lengths (L >> 1e4) add a length-tile grid axis with a
    # (K-1)*dil halo for the long layers so the working set stays inside v7x's 64 MiB VMEM;
    # at L=500 the whole trunk fits per batch element (~3 MiB).
    hin = pl.pallas_call(
        functools.partial(_convnet_kernel, cfg=cfg, rsign=p["roll_sign"]),
        out_shape=jax.ShapeDtypeStruct((B, T, CP), jnp.float32),
        grid=(B,),
        in_specs=[
            pl.BlockSpec((None, c0["L_out"], CP), lambda b: (b, 0, 0)),
            pl.BlockSpec((NG, CP, CP), lambda b: (0, 0, 0)),   # constant block -> fetched once
            pl.BlockSpec((NL, 1, CP), lambda b: (0, 0, 0)),
            pl.BlockSpec((NL, 1, CP), lambda b: (0, 0, 0)),
        ],
        out_specs=pl.BlockSpec((None, T, CP), lambda b: (b, 0, 0)),
        scratch_shapes=[pltpu.VMEM((buf_rows, CP), jnp.float32),
                        pltpu.VMEM((buf_rows, CP), jnp.float32)],
        compiler_params=pltpu.CompilerParams(
            dimension_semantics=("parallel",),        # batch axis -> both v7x TensorCores
            vmem_limit_bytes=32 * 1024 * 1024,
        ),
    )(x0, p["w"], p["scale"], p["shift"])

    hp = p["head"]
    idx = T // 2 + 1   # PyTorch default TSSbinIdx for pool='bin'
    out_dim = hp["bh"].shape[1]
    return pl.pallas_call(
        functools.partial(_head_kernel, H=hp["H"], idx=idx),
        out_shape=jax.ShapeDtypeStruct((B, out_dim), jnp.float32),
        in_specs=[VMEM_SPEC] * 13,
        out_specs=VMEM_SPEC,
    )(hin, hp["pw"], hp["pb"], hp["wih"], hp["bih"], hp["whh"], hp["bhh"],
      hp["w1"], hp["b1"], hp["w2"], hp["b2"], hp["wh"], hp["bh"])


# ----------------------------------------------------------------------------
# Synthetic parameters (PyTorch layouts) + packing / folding
# ----------------------------------------------------------------------------
def make_layer_defs(nf):
    c3, c4, c5, c6 = 3 * nf, 4 * nf, 5 * nf, 6 * nf
    return (
        dict(cin=4,  cout=c3, K=11, pad=5, dil=1, bias=True,  bn=False, act="none", pool=1),
        dict(cin=c3, cout=c3, K=11, pad=5, dil=1, bias=True,  bn=False, act="relu", pool=5),
        dict(cin=c3, cout=c4, K=9,  pad=4, dil=1, bias=False, bn=True,  act="relu", pool=1),
        dict(cin=c4, cout=c4, K=9,  pad=4, dil=1, bias=True,  bn=False, act="relu", pool=5),
        dict(cin=c4, cout=c5, K=7,  pad=3, dil=1, bias=False, bn=True,  act="relu", pool=1),
        dict(cin=c5, cout=c5, K=7,  pad=3, dil=1, bias=True,  bn=False, act="relu", pool=2),
        dict(cin=c5, cout=c6, K=5,  pad=2, dil=1, bias=False, bn=True,  act="relu", pool=1),
        dict(cin=c6, cout=c6, K=5,  pad=2, dil=1, bias=True,  bn=False, act="relu", pool=2),
        # dconv1
        dict(cin=c6, cout=c4, K=5, pad=4, dil=2, bias=False, bn=True, act="gelu", pool=1),
        dict(cin=c4, cout=c6, K=5, pad=2, dil=1, bias=False, bn=True, act="none", pool=1),
        # dconv2
        dict(cin=c6, cout=c4, K=5, pad=8, dil=4, bias=False, bn=True, act="gelu", pool=1),
        dict(cin=c4, cout=c6, K=5, pad=2, dil=1, bias=False, bn=True, act="none", pool=1),
    )


def init_params(key, nf, embed_dim, ff_dim, out_dim):
    defs = make_layer_defs(nf)
    keys = iter(jax.random.split(key, 256))

    def nrm(shape, s=0.1):
        return (s * jax.random.normal(next(keys), shape)).astype(jnp.float32)

    def bn(c):
        return dict(gamma=1.0 + nrm((c,)), beta=nrm((c,)), mean=nrm((c,)),
                    var=(1.0 + 0.1 * jnp.abs(jax.random.normal(next(keys), (c,)))
                         ).astype(jnp.float32))

    convs = [dict(w=nrm((d["cout"], d["cin"], d["K"])),
                  b=nrm((d["cout"],)) if d["bias"] else None,
                  bn=bn(d["cout"]) if d["bn"] else None) for d in defs]
    E, H, F = embed_dim, embed_dim // 2, ff_dim
    gru = []
    for _ in range(2):  # layer-1 input is the bidirectional concat 2H == E
        lp = {}
        for dd in ("f", "b"):
            lp[f"w_ih_{dd}"] = nrm((3 * H, E))
            lp[f"w_hh_{dd}"] = nrm((3 * H, H))
            lp[f"b_ih_{dd}"] = nrm((3 * H,))
            lp[f"b_hh_{dd}"] = nrm((3 * H,))
        gru.append(lp)
    return dict(conv=convs, proj_w=nrm((E, 6 * nf, 1)), proj_b=nrm((E,)), gru=gru,
                lin1_w=nrm((F, E)), lin1_b=nrm((F,)),
                lin2_w=nrm((E, F)), lin2_b=nrm((E,)),
                head_w=nrm((out_dim, E)), head_b=nrm((out_dim,)))


def _pack_conv_weight(w):
    """torch (Cout, Cin, K) -> (G, 128, 128): tap j of group g occupies rows [j*Cin,(j+1)*Cin)."""
    cout, cin, k = w.shape
    gs = CP // cin
    g_n = -(-k // gs)
    wt = jnp.transpose(w, (2, 1, 0))                  # (K, Cin, Cout)
    wp = jnp.zeros((g_n, CP, CP), jnp.float32)
    for kk in range(k):
        g, j = kk // gs, kk % gs
        wp = wp.at[g, j * cin:(j + 1) * cin, :cout].set(wt[kk])
    return wp


def _fold_scale_shift(lr):
    """BatchNorm (running stats) and/or conv bias folded to a per-channel scale & shift."""
    cout = lr["w"].shape[0]
    if lr["bn"] is not None:
        bn = lr["bn"]
        scale = bn["gamma"] / jnp.sqrt(bn["var"] + 1e-5)
        shift = bn["beta"] - bn["mean"] * scale
        if lr["b"] is not None:
            shift = shift + lr["b"] * scale
    else:
        scale = jnp.ones((cout,), jnp.float32)
        shift = lr["b"] if lr["b"] is not None else jnp.zeros((cout,), jnp.float32)
    return jnp.pad(scale, (0, CP - cout)), jnp.pad(shift, (0, CP - cout))


def prepare_params(raw, defs, L):
    w_groups, scales, shifts, cfg = [], [], [], []
    w_off, l_in = 0, L
    for i, d in enumerate(defs):
        lr = raw["conv"][i]
        cout, cin, k = lr["w"].shape
        gs = CP // cin
        g_n = -(-k // gs)
        l_out = l_in + 2 * d["pad"] - d["dil"] * (k - 1)
        assert d["pool"] == 1 or l_out % d["pool"] == 0, "MaxPool floor-mode unsupported"
        assert d["pad"] <= HALO
        l_new = l_out // d["pool"]
        if i >= 8:
            assert l_new == l_in and d["pool"] == 1   # dconv layers preserve length
        w_groups.append(_pack_conv_weight(lr["w"]))
        s, sh = _fold_scale_shift(lr)
        scales.append(s)
        shifts.append(sh)
        cfg.append(dict(K=k, dil=d["dil"], pad=d["pad"], cin=cin, gs=gs, G=g_n,
                        w_off=w_off, L_in=l_in, L_out=l_out, L_new=l_new,
                        act=d["act"], pool=d["pool"]))
        w_off += g_n
        l_in = l_new
    assert cfg[0]["G"] == 1          # layer 0 is im2col-packed wrapper-side (single dot)

    # finetune head weights (concatenated per layer/direction; bf16 MXU operands)
    E = raw["proj_b"].shape[0]
    H = E // 2
    c6 = raw["proj_w"].shape[1]
    bf16 = jnp.bfloat16
    pw = jnp.zeros((CP, E), jnp.float32).at[:c6, :].set(raw["proj_w"][:, :, 0].T)
    g0, g1 = raw["gru"]
    head = dict(
        pw=pw.astype(bf16), pb=raw["proj_b"].reshape(1, E),
        wih=jnp.stack([jnp.concatenate([g["w_ih_f"].T, g["w_ih_b"].T], axis=1)
                       for g in (g0, g1)]).astype(bf16),
        bih=jnp.stack([jnp.concatenate([g["b_ih_f"], g["b_ih_b"]]).reshape(1, 6 * H)
                       for g in (g0, g1)]),
        whh=jnp.stack([g0["w_hh_f"].T, g0["w_hh_b"].T,
                       g1["w_hh_f"].T, g1["w_hh_b"].T]).astype(bf16),
        bhh=jnp.stack([g0["b_hh_f"], g0["b_hh_b"],
                       g1["b_hh_f"], g1["b_hh_b"]]).reshape(4, 1, 3 * H),
        w1=raw["lin1_w"].T.astype(bf16), b1=raw["lin1_b"].reshape(1, -1),
        w2=raw["lin2_w"].T.astype(bf16), b2=raw["lin2_b"].reshape(1, -1),
        wh=raw["head_w"].T.astype(bf16), bh=raw["head_b"].reshape(1, -1),
        H=H,
    )
    return dict(
        w=jnp.concatenate(w_groups, axis=0).astype(bf16),
        scale=jnp.stack(scales).reshape(len(defs), 1, CP),
        shift=jnp.stack(shifts).reshape(len(defs), 1, CP),
        cfg=tuple(cfg),
        head=head,
        roll_sign=_detect_roll_sign(),
    )


# ----------------------------------------------------------------------------
# Pure-JAX float32 reference (mirrors the PyTorch eval-mode forward)
# ----------------------------------------------------------------------------
def reference_forward(raw, x_ncl, defs):
    f32 = jnp.float32
    gelu = lambda v: 0.5 * v * (1.0 + _erf_exact_ref(v * 0.7071067811865476))
    acts = {"relu": lambda v: jnp.maximum(v, 0.0), "gelu": gelu, "none": lambda v: v}

    def conv1d(x, w, pad, dil):                       # x (B,L,Cin), w (Cout,Cin,K)
        k = w.shape[2]
        xp = jnp.pad(x, ((0, 0), (pad, pad), (0, 0)))
        l_out = x.shape[1] + 2 * pad - dil * (k - 1)
        y = 0.0
        for kk in range(k):
            y = y + jnp.einsum("blc,oc->blo",
                               xp[:, kk * dil:kk * dil + l_out, :], w[:, :, kk])
        return y

    def run_layer(x, lr, d):
        y = conv1d(x, lr["w"], d["pad"], d["dil"])
        if lr["b"] is not None:
            y = y + lr["b"]
        if lr["bn"] is not None:
            bn = lr["bn"]
            y = (y - bn["mean"]) / jnp.sqrt(bn["var"] + 1e-5) * bn["gamma"] + bn["beta"]
        y = acts[d["act"]](y)
        if d["pool"] > 1:
            bsz, l, c = y.shape
            y = y.reshape(bsz, l // d["pool"], d["pool"], c).max(axis=2)
        return y

    h = jnp.transpose(x_ncl, (0, 2, 1)).astype(f32)
    for i in range(8):
        h = run_layer(h, raw["conv"][i], defs[i])
    out1 = h
    h = run_layer(out1, raw["conv"][8], defs[8])
    out2 = run_layer(h, raw["conv"][9], defs[9])
    z = gelu(out2 + out1)
    h = run_layer(z, raw["conv"][10], defs[10])
    out3 = run_layer(h, raw["conv"][11], defs[11])
    hin = gelu(out2 + out3)                            # (B, T, C6)

    xp = jnp.einsum("btc,ec->bte", hin, raw["proj_w"][:, :, 0]) + raw["proj_b"]
    T = xp.shape[1]
    H = raw["gru"][0]["w_hh_f"].shape[1]

    def run_dir(seq, wih, whh, bih, bhh, reverse):
        hh = jnp.zeros((seq.shape[0], H), f32)
        outs = [None] * T
        order = range(T - 1, -1, -1) if reverse else range(T)
        for t in order:
            xg = seq[:, t, :] @ wih.T + bih
            hg = hh @ whh.T + bhh
            r = jax.nn.sigmoid(xg[:, :H] + hg[:, :H])
            zz = jax.nn.sigmoid(xg[:, H:2 * H] + hg[:, H:2 * H])
            n = jnp.tanh(xg[:, 2 * H:] + r * hg[:, 2 * H:])
            hh = (1.0 - zz) * n + zz * hh
            outs[t] = hh
        return jnp.stack(outs, axis=1)

    seq = xp
    for g in raw["gru"]:
        of = run_dir(seq, g["w_ih_f"], g["w_hh_f"], g["b_ih_f"], g["b_hh_f"], False)
        ob = run_dir(seq, g["w_ih_b"], g["w_hh_b"], g["b_ih_b"], g["b_hh_b"], True)
        seq = jnp.concatenate([of, ob], axis=-1)
    y = jnp.maximum(seq @ raw["lin1_w"].T + raw["lin1_b"], 0.0)
    y = jnp.maximum(y @ raw["lin2_w"].T + raw["lin2_b"], 0.0)
    xs = xp + y
    idx = T // 2 + 1
    return xs[:, idx, :] @ raw["head_w"].T + raw["head_b"]


# ----------------------------------------------------------------------------
if __name__ == "__main__":
    # pre_trained_model_config = {n_filters: 8, embed_dim: 32, feedforward_dim: 64}
    nf, embed_dim, ff_dim, out_dim = 8, 32, 64, 10
    B, L = 2, 500          # L=500 -> pools /5 /5 /2 /2 -> T = 5, TSSbinIdx = 3

    key = jax.random.PRNGKey(0)
    k_params, k_x = jax.random.split(key)
    defs = make_layer_defs(nf)
    raw = init_params(k_params, nf, embed_dim, ff_dim, out_dim)
    params = prepare_params(raw, defs, L)
    x = jax.random.normal(k_x, (B, 4, L), dtype=jnp.float32)   # NCL, like torch Conv1d input

    fwd = jax.jit(lambda inp: convnet_forward(params, inp))
    out = jax.block_until_ready(fwd(x))
    assert out.shape == (B, out_dim) and out.dtype == jnp.float32

    # Correctness check against a pure-JAX float32 reference (bf16 MXU operands in the
    # kernels introduce a small drift; compare at a tolerance relative to the output scale).
    ref = jax.block_until_ready(jax.jit(lambda inp: reference_forward(raw, inp, defs))(x))
    max_err = float(jnp.max(jnp.abs(out - ref)))
    ref_scale = max(float(jnp.max(jnp.abs(ref))), 1.0)
    assert max_err <= 0.08 * ref_scale, (
        f"kernel/reference mismatch: max|err|={max_err:.4e} vs max|ref|={ref_scale:.4e}")

    print("KERNEL_OK")
</pallas_src>

<mosaic_0001>
module attributes {stable_mosaic.version = 11 : i64} {
  func.func @_roll_probe_kernel(%arg0: memref<8x128xf32, #tpu.memory_space<vmem>>, %arg1: memref<8x128xf32, #tpu.memory_space<vmem>>) attributes {dimension_semantics = [], scalar_prefetch = 0 : i64, scratch_operands = 0 : i64, tpu.core_type = #tpu.core_type<tc>} {
    %c0 = arith.constant 0 : index
    %c0_0 = arith.constant 0 : index
    %0 = vector.load %arg0[%c0, %c0_0] : memref<8x128xf32, #tpu.memory_space<vmem>>, vector<8x128xf32>
    %c1_i32 = arith.constant 1 : i32
    %1 = tpu.dynamic_rotate %0 by %c1_i32 dim 1 : vector<8x128xf32>, i32 -> vector<8x128xf32>
    %c0_1 = arith.constant 0 : index
    %c0_2 = arith.constant 0 : index
    %2 = vector.load %arg1[%c0_1, %c0_2] : memref<8x128xf32, #tpu.memory_space<vmem>>, vector<8x128xf32>
    tpu.vector_store %arg1[%c0_1, %c0_2], %1 {strides = array<i32>} : memref<8x128xf32, #tpu.memory_space<vmem>>, vector<8x128xf32>,
    return
  }
}

</mosaic_0001>

<llo_original>
// kernel: tpu_custom_call.1
$region0: #{tpu_custom_call.1}
  #allocation0 [shape = 'u32[]', space=smem, size = 0x4, offset = 0x4, fixed_abs, tag = 'smem constant byte address 0x4 - core index']
  #allocation1 [shape = 'u32[144,128]{1,0:T(1,128)}', space=vmem, size = 0x12000, scoped, tag = 'internal scratch']
  %s0 = inlined_call_operand.hbm [shape: f32[8,128], index: 0, kind: input, shape index: {}]
  %s1 = inlined_call_operand.hbm [shape: f32[8,128], index: 1, kind: output, shape index: {}]
  %s2 = sld [smem:[#allocation0]]
  $region18: #{tpu_custom_call.1} parent=0
    _
  %s4 = ssub.s32 1, %s2
  %s5 = scalar_select 0, %s4, %s2
  $region1: #{tpu_custom_call.1} parent=0
    #allocation2 [shape = 'u8[4096]{0}', space=vmem, size = 0x1000, scoped, tag = 'input window, operand 0, single buffered']
    #allocation3 [shape = 's32[1]{0}', space=sflag, size = 0x4, scoped, tag = 'scoped memory for tpu_custom_call.1']
    #allocation4 [shape = 's32[1]{0}', space=sflag, size = 0x4, scoped, tag = 'scoped memory for tpu_custom_call.1']
    #allocation5 [shape = 'u8[4096]{0}', space=vmem, size = 0x1000, scoped, tag = 'output window, operand 0, single buffered']
    %6 = vsyncpa [#allocation3], 0
    %7 = vsyncpa [#allocation4], 0
    // Predicated region
    $region2: #{tpu_custom_call.1} parent=1 // pred_check
      _
    $region3: #{tpu_custom_call.1} parent=1 // pred_check_branch
      %9 = sbr.rel (0) target = $region5
    $region4: #{tpu_custom_call.1} parent=1 // pred_region
      %s11 = ssub.s32 128, 128
      %12 = vsyncadd [#allocation3], %s11
      %s14 = sshll.u32 [#allocation2], 4
      %s15 = int_to_ptr.vmem [resolvable:$true] %s14
      %17 = dma.hbm_to_vmem [thread:$0]  %s0, 128, %s15, [#allocation3]
    $region5: #{tpu_custom_call.1} parent=1 // pred_fallthru
      _
    // Predicated region
    $region6: #{tpu_custom_call.1} parent=1 // pred_check
      _
    $region7: #{tpu_custom_call.1} parent=1 // pred_check_branch
      %19 = sbr.rel (0) target = $region9
    $region8: #{tpu_custom_call.1} parent=1 // pred_region
      %20 = dma.done [#allocation3], 128
    $region9: #{tpu_custom_call.1} parent=1 // pred_fallthru
      _
    %v21 = vld [vmem:[#allocation2] sm:$0xff]
    %22 = vrot.lane.b32.xlu0 %v21, 1
    %v23 = vpop.permute.xlu0 %22
    %24 = vst [vmem:[#allocation5] sm:$0xff] %v23
    // Predicated region
    $region10: #{tpu_custom_call.1} parent=1 // pred_check
      _
    $region11: #{tpu_custom_call.1} parent=1 // pred_check_branch
      %26 = sbr.rel (0) target = $region13
    $region12: #{tpu_custom_call.1} parent=1 // pred_region
      %s28 = ssub.s32 128, 128
      %29 = vsyncadd [#allocation4], %s28
      %s31 = sshll.u32 [#allocation5], 4
      %s32 = int_to_ptr.vmem [resolvable:$true] %s31
      %34 = dma.vmem_to_hbm [thread:$0]  %s32, 128, %s1, [#allocation4]
    $region13: #{tpu_custom_call.1} parent=1 // pred_fallthru
      _
    // Predicated region
    $region14: #{tpu_custom_call.1} parent=1 // pred_check
      _
    $region15: #{tpu_custom_call.1} parent=1 // pred_check_branch
      %36 = sbr.rel (0) target = $region17
    $region16: #{tpu_custom_call.1} parent=1 // pred_region
      %37 = dma.done [#allocation4], 128
    $region17: #{tpu_custom_call.1} parent=1 // pred_fallthru
      _
    %38 = vsyncpa [#allocation3], 1
    %39 = vsyncpa [#allocation4], 1

</llo_original>
